<compile_context>
chip_gen: v6e
topology: v6e:2x2x1
jax: 0.10.0
libtpu: 0.0.40
codegen_flags: <defaults>
</compile_context>

<pallas_src>
import functools
import math

import jax
import jax.numpy as jnp
from jax import lax
from jax.experimental import pallas as pl
from jax.experimental.pallas import tpu as pltpu

_SQRT_2_OVER_PI = 0.7978845608028654


def _round_up(x, m):
    return ((x + m - 1) // m) * m


def _gelu_tanh(u):
    # GELU(approximate='tanh'), matches torch.nn.GELU(approximate='tanh').
    return 0.5 * u * (1.0 + jnp.tanh(_SQRT_2_OVER_PI * (u + 0.044715 * u * u * u)))


def _dit_mlp_kernel(x_ref, shift_ref, scale_ref, gate_ref,
                    w1_ref, b1_ref, w2_ref, b2_ref,
                    out_ref, h_sc, acc_sc, *, eps):
    """Grid = (batch, token_tiles, hidden_tiles); hidden axis is the reduction axis."""
    j = pl.program_id(2)

    @pl.when(j == 0)
    def _():
        # LayerNorm (no affine) + modulate, once per (batch, token-tile).
        x = x_ref[0].astype(jnp.float32)                         # (TT, D)
        mu = jnp.mean(x, axis=-1, keepdims=True)
        var = jnp.mean(jnp.square(x - mu), axis=-1, keepdims=True)
        xn = (x - mu) * lax.rsqrt(var + eps)
        h = xn * (1.0 + scale_ref[0].astype(jnp.float32)) \
            + shift_ref[0].astype(jnp.float32)
        h_sc[...] = h.astype(h_sc.dtype)                         # store in MXU dtype (bf16)
        acc_sc[...] = jnp.zeros_like(acc_sc)

    # First matmul on the current hidden tile; operands already in the MXU dtype,
    # accumulation in f32.
    u = jnp.dot(h_sc[...], w1_ref[...], preferred_element_type=jnp.float32)
    u = u + b1_ref[...].astype(jnp.float32)
    g = _gelu_tanh(u)
    # Second matmul: accumulate this hidden tile's (TT, D) contribution.
    acc_sc[...] += jnp.dot(g.astype(w2_ref.dtype), w2_ref[...],
                           preferred_element_type=jnp.float32)

    @pl.when(j == pl.num_programs(2) - 1)
    def _():
        y = acc_sc[...] + b2_ref[...].astype(jnp.float32)
        out = x_ref[0].astype(jnp.float32) + gate_ref[0].astype(jnp.float32) * y
        out_ref[0] = out.astype(out_ref.dtype)


def dit_mlp(x, shift, scale, gate, w1, b1, w2, b2, *, eps=1e-6,
            matmul_dtype=jnp.bfloat16, token_tile=512,
            vmem_limit_bytes=48 * 1024 * 1024):
    """Pallas implementation of RefDiTMLP.forward.

    Args:
      x: (B, D) or (B, T, D) input.
      shift, scale, gate: broadcastable to x (e.g. (B, D), (B, 1, D) or (B, T, D)).
      w1: (D, H) first Linear weight (input-major), b1: (H,).
      w2: (H, D) second Linear weight (input-major), b2: (D,).
    Returns:
      Array with the same shape and dtype as x.
    """
    orig_shape = x.shape
    D = x.shape[-1]
    H = w1.shape[-1]
    x3 = x if x.ndim == 3 else x[:, None, :]
    B, T, _ = x3.shape

    def _prep_mod(a):
        a = jnp.asarray(a)
        if a.ndim == 1:                # (D,)
            a = a[None, None, :]
        elif a.ndim == 2:              # (B, D) or (1, D)
            a = a[:, None, :]
        if a.shape[1] == 1:
            # Per-batch modulation: keep it (B, 1, D) -- never broadcast over T.
            return jnp.broadcast_to(a, (B, 1, D)), False
        return jnp.broadcast_to(a, (B, T, D)), True

    shift3, shift_tok = _prep_mod(shift)
    scale3, scale_tok = _prep_mod(scale)
    gate3, gate_tok = _prep_mod(gate)

    # --- tiling ---
    TT = min(token_tile, _round_up(T, 8))         # token tile (multiple of 8 sublanes)
    n_t_tiles = (T + TT - 1) // TT                # ragged last tile handled by Pallas

    w_itemsize = jnp.dtype(matmul_dtype).itemsize
    # Weights-resident mode: if both (double-buffered) bf16 weights fit in a small VMEM
    # budget, use a single hidden tile with a constant block index so they are DMA'd from
    # HBM exactly once for the whole grid.  Otherwise stream hidden tiles sized so the
    # double-buffered weight tiles stay well inside the VMEM budget.
    full_w_buf_bytes = 2 * 2 * D * H * w_itemsize      # 2 weights x 2 pipeline buffers
    if full_w_buf_bytes <= 20 * 1024 * 1024 or H % 128 != 0:
        # TODO(synk): H not a multiple of 128 falls back to a single hidden tile, which can
        # blow VMEM for very large, oddly-shaped H.
        TH = H
    else:
        TH = 128
        for cand in (2048, 1536, 1280, 1024, 896, 768, 640, 512, 384, 256, 128):
            if H % cand == 0 and 2 * 2 * D * cand * w_itemsize <= 16 * 1024 * 1024:
                TH = cand
                break
    n_h_tiles = H // TH
    grid = (B, n_t_tiles, n_h_tiles)

    w1c = w1.astype(matmul_dtype)
    w2c = w2.astype(matmul_dtype)
    b1c = b1.reshape(1, H).astype(jnp.float32)
    b2c = b2.reshape(1, D).astype(jnp.float32)

    def _mod_spec(per_token):
        if per_token:
            return pl.BlockSpec((1, TT, D), lambda b, i, j: (b, i, 0))
        return pl.BlockSpec((1, 1, D), lambda b, i, j: (b, 0, 0))

    x_itemsize = jnp.dtype(x.dtype).itemsize
    weight_passes = 1 if TH == H else B * n_t_tiles   # streamed weights re-read per row tile
    cost = pl.CostEstimate(
        flops=4 * B * T * D * H,                       # two matmuls
        transcendentals=B * T * H,                     # tanh in GELU
        bytes_accessed=int(
            2 * B * T * D * x_itemsize                                # x in + out
            + (shift3.size + scale3.size + gate3.size) * x_itemsize  # unbroadcast modulation
            + weight_passes * (w1c.size + w2c.size) * w_itemsize     # weight traffic
            + (b1c.size + b2c.size) * 4),
    )

    kernel = functools.partial(_dit_mlp_kernel, eps=eps)
    out = pl.pallas_call(
        kernel,
        out_shape=jax.ShapeDtypeStruct((B, T, D), x.dtype),
        grid_spec=pltpu.PrefetchScalarGridSpec(
            num_scalar_prefetch=0,
            grid=grid,
            in_specs=[
                pl.BlockSpec((1, TT, D), lambda b, i, j: (b, i, 0)),   # x
                _mod_spec(shift_tok),                                  # shift
                _mod_spec(scale_tok),                                  # scale
                _mod_spec(gate_tok),                                   # gate
                pl.BlockSpec((D, TH), lambda b, i, j: (0, j)),         # w1 column tile
                pl.BlockSpec((1, TH), lambda b, i, j: (0, j)),         # b1 tile
                pl.BlockSpec((TH, D), lambda b, i, j: (j, 0)),         # w2 row tile
                pl.BlockSpec((1, D), lambda b, i, j: (0, 0)),          # b2
            ],
            out_specs=pl.BlockSpec((1, TT, D), lambda b, i, j: (b, i, 0)),
            scratch_shapes=[
                pltpu.VMEM((TT, D), matmul_dtype),       # modulated activations (bf16)
                pltpu.VMEM((TT, D), jnp.float32),        # f32 accumulator
            ],
        ),
        compiler_params=pltpu.CompilerParams(
            dimension_semantics=("parallel", "parallel", "arbitrary"),
            vmem_limit_bytes=vmem_limit_bytes),
        cost_estimate=cost,
    )(x3, shift3, scale3, gate3, w1c, b1c, w2c, b2c)

    return out.reshape(orig_shape)


if __name__ == "__main__":
    B, T, D = 2, 8, 32
    mlp_ratio = 4.0
    H = int(D * mlp_ratio)

    key = jax.random.PRNGKey(0)
    kx, ks, kc, kg, kw1, kb1, kw2, kb2 = jax.random.split(key, 8)

    # Deterministic "parameters" (shapes from nn.Linear(D, H) / nn.Linear(H, D)).
    bound1 = 1.0 / math.sqrt(D)
    bound2 = 1.0 / math.sqrt(H)
    w1 = jax.random.uniform(kw1, (D, H), jnp.float32, -bound1, bound1)
    b1 = jax.random.uniform(kb1, (H,), jnp.float32, -bound1, bound1)
    w2 = jax.random.uniform(kw2, (H, D), jnp.float32, -bound2, bound2)
    b2 = jax.random.uniform(kb2, (D,), jnp.float32, -bound2, bound2)

    x = jax.random.normal(kx, (B, T, D), jnp.float32)
    shift = jax.random.normal(ks, (B, 1, D), jnp.float32)
    scale = jax.random.normal(kc, (B, 1, D), jnp.float32)
    gate = jax.random.normal(kg, (B, 1, D), jnp.float32)

    out = dit_mlp(x, shift, scale, gate, w1, b1, w2, b2)
    out = jax.block_until_ready(out)
    assert out.shape == x.shape, out.shape

    # Pure-JAX references (drop=0, so dropout is a no-op).
    mu = x.mean(-1, keepdims=True)
    var = ((x - mu) ** 2).mean(-1, keepdims=True)
    xn = (x - mu) / jnp.sqrt(var + 1e-6)
    h = xn * (1.0 + scale) + shift

    def _mlp(hh, wa, wb, dt):
        u = jnp.dot(hh.astype(dt), wa.astype(dt), preferred_element_type=jnp.float32) + b1
        g = 0.5 * u * (1.0 + jnp.tanh(_SQRT_2_OVER_PI * (u + 0.044715 * u ** 3)))
        return jnp.dot(g.astype(dt), wb.astype(dt), preferred_element_type=jnp.float32) + b2

    # Matched-precision reference (bf16 MXU operands, f32 accumulation) -> tight check.
    ref_bf16 = x + gate * _mlp(h, w1, w2, jnp.bfloat16)
    # Full float32 reference -> loose check (bf16 operand rounding is expected).
    ref_f32 = x + gate * _mlp(h, w1, w2, jnp.float32)

    assert jnp.allclose(out, ref_bf16, atol=5e-3, rtol=5e-3), \
        float(jnp.max(jnp.abs(out - ref_bf16)))
    assert jnp.allclose(out, ref_f32, atol=1e-1, rtol=1e-1), \
        float(jnp.max(jnp.abs(out - ref_f32)))
    print("KERNEL_OK")
</pallas_src>

<mosaic_0001>
module attributes {stable_mosaic.version = 11 : i64} {
  func.func @_dit_mlp_kernel(%arg0: i32, %arg1: i32, %arg2: i32, %arg3: memref<1x8x32xf32, #tpu.memory_space<vmem>>, %arg4: memref<1x1x32xf32, #tpu.memory_space<vmem>>, %arg5: memref<1x1x32xf32, #tpu.memory_space<vmem>>, %arg6: memref<1x1x32xf32, #tpu.memory_space<vmem>>, %arg7: memref<32x128xbf16, #tpu.memory_space<vmem>>, %arg8: memref<1x128xf32, #tpu.memory_space<vmem>>, %arg9: memref<128x32xbf16, #tpu.memory_space<vmem>>, %arg10: memref<1x32xf32, #tpu.memory_space<vmem>>, %arg11: memref<1x8x32xf32, #tpu.memory_space<vmem>>, %arg12: memref<8x32xbf16, #tpu.memory_space<vmem>>, %arg13: memref<8x32xf32, #tpu.memory_space<vmem>>) attributes {dimension_semantics = [#tpu.dimension_semantics<parallel>, #tpu.dimension_semantics<parallel>, #tpu.dimension_semantics<arbitrary>], iteration_bounds = array<i64: 2, 1, 1>, scalar_prefetch = 0 : i64, scratch_operands = 2 : i64, tpu.core_type = #tpu.core_type<tc>, window_params = [{transform_indices = @transform_0, window_bounds = array<i64: 1, 8, 32>}, {transform_indices = @transform_1, window_bounds = array<i64: 1, 1, 32>}, {transform_indices = @transform_2, window_bounds = array<i64: 1, 1, 32>}, {transform_indices = @transform_3, window_bounds = array<i64: 1, 1, 32>}, {transform_indices = @transform_4, window_bounds = array<i64: 32, 128>}, {transform_indices = @transform_5, window_bounds = array<i64: 1, 128>}, {transform_indices = @transform_6, window_bounds = array<i64: 128, 32>}, {pipeline_mode = #tpu.pipeline_mode<synchronous>, transform_indices = @transform_7, window_bounds = array<i64: 1, 32>}, {transform_indices = @transform_8, window_bounds = array<i64: 1, 8, 32>}]} {
    %c0_i32 = arith.constant 0 : i32
    %0 = arith.cmpi eq, %arg2, %c0_i32 : i32
    %1 = arith.extui %0 : i1 to i32
    %c0_i32_0 = arith.constant 0 : i32
    %2 = arith.cmpi ne, %1, %c0_i32_0 : i32
    scf.if %2 {
      %c0_19 = arith.constant 0 : index
      %c0_20 = arith.constant 0 : index
      %c0_21 = arith.constant 0 : index
      %31 = vector.load %arg3[%c0_19, %c0_20, %c0_21] : memref<1x8x32xf32, #tpu.memory_space<vmem>>, vector<1x8x32xf32>
      %32 = vector.shape_cast %31 : vector<1x8x32xf32> to vector<8x32xf32>
      %cst_22 = arith.constant dense<0.000000e+00> : vector<8xf32>
      %33 = vector.multi_reduction <add>, %32, %cst_22 [1] : vector<8x32xf32> to vector<8xf32>
      %34 = vector.shape_cast %33 : vector<8xf32> to vector<8x1xf32>
      %cst_23 = arith.constant 3.200000e+01 : f32
      %35 = vector.broadcast %cst_23 : f32 to vector<8x1xf32>
      %36 = arith.divf %34, %35 : vector<8x1xf32>
      %37 = vector.broadcast %36 : vector<8x1xf32> to vector<8x32xf32>
      %38 = arith.subf %32, %37 : vector<8x32xf32>
      %39 = arith.mulf %38, %38 : vector<8x32xf32>
      %cst_24 = arith.constant dense<0.000000e+00> : vector<8xf32>
      %40 = vector.multi_reduction <add>, %39, %cst_24 [1] : vector<8x32xf32> to vector<8xf32>
      %41 = vector.shape_cast %40 : vector<8xf32> to vector<8x1xf32>
      %cst_25 = arith.constant 3.200000e+01 : f32
      %42 = vector.broadcast %cst_25 : f32 to vector<8x1xf32>
      %43 = arith.divf %41, %42 : vector<8x1xf32>
      %44 = vector.broadcast %36 : vector<8x1xf32> to vector<8x32xf32>
      %45 = arith.subf %32, %44 : vector<8x32xf32>
      %cst_26 = arith.constant 9.99999997E-7 : f32
      %46 = vector.broadcast %cst_26 : f32 to vector<8x1xf32>
      %47 = arith.addf %43, %46 : vector<8x1xf32>
      %48 = math.rsqrt %47 : vector<8x1xf32>
      %49 = vector.broadcast %48 : vector<8x1xf32> to vector<8x32xf32>
      %50 = arith.mulf %45, %49 : vector<8x32xf32>
      %c0_27 = arith.constant 0 : index
      %c0_28 = arith.constant 0 : index
      %c0_29 = arith.constant 0 : index
      %51 = vector.load %arg5[%c0_27, %c0_28, %c0_29] : memref<1x1x32xf32, #tpu.memory_space<vmem>>, vector<1x1x32xf32>
      %52 = vector.shape_cast %51 : vector<1x1x32xf32> to vector<1x32xf32>
      %cst_30 = arith.constant 1.000000e+00 : f32
      %53 = vector.broadcast %cst_30 : f32 to vector<1x32xf32>
      %54 = arith.addf %53, %52 : vector<1x32xf32>
      %55 = vector.broadcast %54 : vector<1x32xf32> to vector<8x32xf32>
      %56 = arith.mulf %50, %55 : vector<8x32xf32>
      %c0_31 = arith.constant 0 : index
      %c0_32 = arith.constant 0 : index
      %c0_33 = arith.constant 0 : index
      %57 = vector.load %arg4[%c0_31, %c0_32, %c0_33] : memref<1x1x32xf32, #tpu.memory_space<vmem>>, vector<1x1x32xf32>
      %58 = vector.shape_cast %57 : vector<1x1x32xf32> to vector<1x32xf32>
      %59 = vector.broadcast %58 : vector<1x32xf32> to vector<8x32xf32>
      %60 = arith.addf %56, %59 : vector<8x32xf32>
      %61 = arith.truncf %60 : vector<8x32xf32> to vector<8x32xbf16>
      %c0_34 = arith.constant 0 : index
      %c0_35 = arith.constant 0 : index
      %62 = vector.load %arg12[%c0_34, %c0_35] : memref<8x32xbf16, #tpu.memory_space<vmem>>, vector<8x32xbf16>
      tpu.vector_store %arg12[%c0_34, %c0_35], %61 {strides = array<i32>} : memref<8x32xbf16, #tpu.memory_space<vmem>>, vector<8x32xbf16>,
      %cst_36 = arith.constant 0.000000e+00 : f32
      %63 = vector.broadcast %cst_36 : f32 to vector<8x32xf32>
      %c0_37 = arith.constant 0 : index
      %c0_38 = arith.constant 0 : index
      %64 = vector.load %arg13[%c0_37, %c0_38] : memref<8x32xf32, #tpu.memory_space<vmem>>, vector<8x32xf32>
      tpu.vector_store %arg13[%c0_37, %c0_38], %63 {strides = array<i32>} : memref<8x32xf32, #tpu.memory_space<vmem>>, vector<8x32xf32>,
    } else {
    }
    %c0 = arith.constant 0 : index
    %c0_1 = arith.constant 0 : index
    %3 = vector.load %arg12[%c0, %c0_1] : memref<8x32xbf16, #tpu.memory_space<vmem>>, vector<8x32xbf16>
    %c0_2 = arith.constant 0 : index
    %c0_3 = arith.constant 0 : index
    %4 = vector.load %arg7[%c0_2, %c0_3] : memref<32x128xbf16, #tpu.memory_space<vmem>>, vector<32x128xbf16>
    %cst = arith.constant dense<0.000000e+00> : vector<8x128xf32>
    %5 = tpu.matmul %3, %4, %cst {dimension_numbers = #tpu.dot_dimension_numbers<[1], [0], [0], [1], [0, 0, 1, 1], [], []>} : vector<8x32xbf16>, vector<32x128xbf16>, vector<8x128xf32> -> vector<8x128xf32>
    %c0_4 = arith.constant 0 : index
    %c0_5 = arith.constant 0 : index
    %6 = vector.load %arg8[%c0_4, %c0_5] : memref<1x128xf32, #tpu.memory_space<vmem>>, vector<1x128xf32>
    %7 = vector.broadcast %6 : vector<1x128xf32> to vector<8x128xf32>
    %8 = arith.addf %5, %7 : vector<8x128xf32>
    %cst_6 = arith.constant 5.000000e-01 : f32
    %9 = vector.broadcast %cst_6 : f32 to vector<8x128xf32>
    %10 = arith.mulf %9, %8 : vector<8x128xf32>
    %cst_7 = arith.constant 4.471500e-02 : f32
    %11 = vector.broadcast %cst_7 : f32 to vector<8x128xf32>
    %12 = arith.mulf %11, %8 : vector<8x128xf32>
    %13 = arith.mulf %12, %8 : vector<8x128xf32>
    %14 = arith.mulf %13, %8 : vector<8x128xf32>
    %15 = arith.addf %8, %14 : vector<8x128xf32>
    %cst_8 = arith.constant 0.797884583 : f32
    %16 = vector.broadcast %cst_8 : f32 to vector<8x128xf32>
    %17 = arith.mulf %16, %15 : vector<8x128xf32>
    %18 = math.tanh %17 : vector<8x128xf32>
    %cst_9 = arith.constant 1.000000e+00 : f32
    %19 = vector.broadcast %cst_9 : f32 to vector<8x128xf32>
    %20 = arith.addf %19, %18 : vector<8x128xf32>
    %21 = arith.mulf %10, %20 : vector<8x128xf32>
    %c0_10 = arith.constant 0 : index
    %c0_11 = arith.constant 0 : index
    %22 = vector.load %arg13[%c0_10, %c0_11] : memref<8x32xf32, #tpu.memory_space<vmem>>, vector<8x32xf32>
    %23 = arith.truncf %21 : vector<8x128xf32> to vector<8x128xbf16>
    %c0_12 = arith.constant 0 : index
    %c0_13 = arith.constant 0 : index
    %24 = vector.load %arg9[%c0_12, %c0_13] : memref<128x32xbf16, #tpu.memory_space<vmem>>, vector<128x32xbf16>
    %cst_14 = arith.constant dense<0.000000e+00> : vector<8x32xf32>
    %25 = tpu.matmul %23, %24, %cst_14 {dimension_numbers = #tpu.dot_dimension_numbers<[1], [0], [0], [1], [0, 0, 1, 1], [], []>} : vector<8x128xbf16>, vector<128x32xbf16>, vector<8x32xf32> -> vector<8x32xf32>
    %26 = arith.addf %22, %25 : vector<8x32xf32>
    %c0_15 = arith.constant 0 : index
    %c0_16 = arith.constant 0 : index
    %27 = vector.load %arg13[%c0_15, %c0_16] : memref<8x32xf32, #tpu.memory_space<vmem>>, vector<8x32xf32>
    tpu.vector_store %arg13[%c0_15, %c0_16], %26 {strides = array<i32>} : memref<8x32xf32, #tpu.memory_space<vmem>>, vector<8x32xf32>,
    %c0_i32_17 = arith.constant 0 : i32
    %28 = arith.cmpi eq, %arg2, %c0_i32_17 : i32
    %29 = arith.extui %28 : i1 to i32
    %c0_i32_18 = arith.constant 0 : i32
    %30 = arith.cmpi ne, %29, %c0_i32_18 : i32
    scf.if %30 {
      %c0_19 = arith.constant 0 : index
      %c0_20 = arith.constant 0 : index
      %31 = vector.load %arg13[%c0_19, %c0_20] : memref<8x32xf32, #tpu.memory_space<vmem>>, vector<8x32xf32>
      %c0_21 = arith.constant 0 : index
      %c0_22 = arith.constant 0 : index
      %32 = vector.load %arg10[%c0_21, %c0_22] : memref<1x32xf32, #tpu.memory_space<vmem>>, vector<1x32xf32>
      %33 = vector.broadcast %32 : vector<1x32xf32> to vector<8x32xf32>
      %34 = arith.addf %31, %33 : vector<8x32xf32>
      %c0_23 = arith.constant 0 : index
      %c0_24 = arith.constant 0 : index
      %c0_25 = arith.constant 0 : index
      %35 = vector.load %arg3[%c0_23, %c0_24, %c0_25] : memref<1x8x32xf32, #tpu.memory_space<vmem>>, vector<1x8x32xf32>
      %36 = vector.shape_cast %35 : vector<1x8x32xf32> to vector<8x32xf32>
      %c0_26 = arith.constant 0 : index
      %c0_27 = arith.constant 0 : index
      %c0_28 = arith.constant 0 : index
      %37 = vector.load %arg6[%c0_26, %c0_27, %c0_28] : memref<1x1x32xf32, #tpu.memory_space<vmem>>, vector<1x1x32xf32>
      %38 = vector.shape_cast %37 : vector<1x1x32xf32> to vector<1x32xf32>
      %39 = vector.broadcast %38 : vector<1x32xf32> to vector<8x32xf32>
      %40 = arith.mulf %39, %34 : vector<8x32xf32>
      %41 = arith.addf %36, %40 : vector<8x32xf32>
      %c0_29 = arith.constant 0 : index
      %c0_30 = arith.constant 0 : index
      %c0_31 = arith.constant 0 : index
      %42 = vector.load %arg11[%c0_29, %c0_30, %c0_31] : memref<1x8x32xf32, #tpu.memory_space<vmem>>, vector<1x8x32xf32>
      %43 = vector.shape_cast %42 : vector<1x8x32xf32> to vector<8x32xf32>
      %44 = vector.shape_cast %41 : vector<8x32xf32> to vector<1x8x32xf32>
      tpu.vector_store %arg11[%c0_29, %c0_30, %c0_31], %44 {strides = array<i32>} : memref<1x8x32xf32, #tpu.memory_space<vmem>>, vector<1x8x32xf32>,
    } else {
    }
    return
  }
  func.func @transform_0(%arg0: i32, %arg1: i32, %arg2: i32) -> (i32, i32, i32) {
    %c0_i32 = arith.constant 0 : i32
    %c0_i32_0 = arith.constant 0 : i32
    return %arg0, %arg1, %c0_i32 : i32, i32, i32
  }
  func.func @transform_1(%arg0: i32, %arg1: i32, %arg2: i32) -> (i32, i32, i32) {
    %c0_i32 = arith.constant 0 : i32
    %c0_i32_0 = arith.constant 0 : i32
    %c0_i32_1 = arith.constant 0 : i32
    return %arg0, %c0_i32, %c0_i32_0 : i32, i32, i32
  }
  func.func @transform_2(%arg0: i32, %arg1: i32, %arg2: i32) -> (i32, i32, i32) {
    %c0_i32 = arith.constant 0 : i32
    %c0_i32_0 = arith.constant 0 : i32
    %c0_i32_1 = arith.constant 0 : i32
    return %arg0, %c0_i32, %c0_i32_0 : i32, i32, i32
  }
  func.func @transform_3(%arg0: i32, %arg1: i32, %arg2: i32) -> (i32, i32, i32) {
    %c0_i32 = arith.constant 0 : i32
    %c0_i32_0 = arith.constant 0 : i32
    %c0_i32_1 = arith.constant 0 : i32
    return %arg0, %c0_i32, %c0_i32_0 : i32, i32, i32
  }
  func.func @transform_4(%arg0: i32, %arg1: i32, %arg2: i32) -> (i32, i32) {
    %c0_i32 = arith.constant 0 : i32
    %c0_i32_0 = arith.constant 0 : i32
    return %c0_i32, %arg2 : i32, i32
  }
  func.func @transform_5(%arg0: i32, %arg1: i32, %arg2: i32) -> (i32, i32) {
    %c0_i32 = arith.constant 0 : i32
    %c0_i32_0 = arith.constant 0 : i32
    return %c0_i32, %arg2 : i32, i32
  }
  func.func @transform_6(%arg0: i32, %arg1: i32, %arg2: i32) -> (i32, i32) {
    %c0_i32 = arith.constant 0 : i32
    %c0_i32_0 = arith.constant 0 : i32
    return %arg2, %c0_i32 : i32, i32
  }
  func.func @transform_7(%arg0: i32, %arg1: i32, %arg2: i32) -> (i32, i32) {
    %c0_i32 = arith.constant 0 : i32
    %c0_i32_0 = arith.constant 0 : i32
    %c0_i32_1 = arith.constant 0 : i32
    return %c0_i32, %c0_i32_0 : i32, i32
  }
  func.func @transform_8(%arg0: i32, %arg1: i32, %arg2: i32) -> (i32, i32, i32) {
    %c0_i32 = arith.constant 0 : i32
    %c0_i32_0 = arith.constant 0 : i32
    return %arg0, %arg1, %c0_i32 : i32, i32, i32
  }
}

</mosaic_0001>

<llo_original>
// kernel: tpu_custom_call.1
$region0: #{tpu_custom_call.1}
  #allocation0 [shape = 'u32[]', space=smem, size = 0x4, offset = 0x4, fixed_abs, tag = 'smem constant byte address 0x4 - core index']
  #allocation1 [shape = 'u32[144,128]{1,0:T(1,128)}', space=vmem, size = 0x12000, scoped, tag = 'internal scratch']
  #allocation2 [shape = 'bf16[8,32]{1,0:T(8,128)(2,1)}', space=vmem, size = 0x800, scoped, tag = 'scratch operand']
  #allocation3 [shape = 'f32[8,32]{1,0:T(8,128)}', space=vmem, size = 0x1000, scoped, tag = 'scratch operand']
  %s0 = inlined_call_operand.vmem [shape: f32[2,8,32], index: 0, kind: input, shape index: {}]
  %s1 = inlined_call_operand.vmem [shape: f32[2,1,32], index: 1, kind: input, shape index: {}]
  %s2 = inlined_call_operand.vmem [shape: f32[2,1,32], index: 2, kind: input, shape index: {}]
  %s3 = inlined_call_operand.vmem [shape: f32[2,1,32], index: 3, kind: input, shape index: {}]
  %s4 = inlined_call_operand.vmem [shape: bf16[32,128], index: 4, kind: input, shape index: {}]
  %s5 = inlined_call_operand.vmem [shape: f32[1,128], index: 5, kind: input, shape index: {}]
  %s6 = inlined_call_operand.vmem [shape: bf16[128,32], index: 6, kind: input, shape index: {}]
  %s7 = inlined_call_operand.vmem [shape: f32[1,32], index: 7, kind: input, shape index: {}]
  %s8 = inlined_call_operand.hbm [shape: f32[2,8,32], index: 8, kind: output, shape index: {}]
  %s9 = sld [smem:[#allocation0]]
  $region73: #{tpu_custom_call.1} parent=0
    _
  %s11 = ssub.s32 1, %s9
  %s12 = scalar_select 0, %s11, %s9
  $region1: #{tpu_custom_call.1} parent=0
    #allocation4 [shape = 'u8[8192]{0}', space=vmem, size = 0x2000, scoped, tag = 'output window, operand 0']
    #allocation5 [shape = 's32[2]{0}', space=sflag, size = 0x8, scoped, tag = 'scoped memory for tpu_custom_call.1']
    %13 = vsyncpa [#allocation5], 0
    %s14 = scalar_lea.sflag [#allocation5], 1
    %15 = vsyncpa %s14, 0
    loop: start=0, step=1, limit=4
    $region2: #{tpu_custom_call.1} parent=1 // loop_pre_header
      _
    $region3: #{tpu_custom_call.1} parent=1 // loop_header
      %s17 = sphi 0, %s21
      %p18 = scmp.ge.s32.totalorder %s17, 4
      %s24 = sphi 0, %s43
      %s25 = sphi 0, %s39
      %s26 = sphi 0, %s35
      %s27 = sphi 0, %s24
      %s28 = sphi 0, %s25
      %s29 = sphi 0, %s26
      %s30 = sphi 0, %s27
      %s31 = sphi 0, %s28
      %s32 = sphi 0, %s29
      %s48 = sphi 0, %s50
      %s51 = sphi 0, %s48
      %s52 = sphi 0, %s51
      %s68 = sphi 0, %s52
      %s74 = sphi 0, %s76
      %s77 = sphi 0, %s74
      %s78 = sphi 0, %s77
      %s94 = sphi 0, %s78
      %s100 = sphi 0, %s102
      %s103 = sphi 0, %s100
      %s104 = sphi 0, %s103
      %s120 = sphi 0, %s104
      %s126 = sphi 0, %s128
      %s129 = sphi 0, %s126
      %s130 = sphi 0, %s129
      %s146 = sphi 0, %s130
      %s152 = sphi 0, %s154
      %s155 = sphi 0, %s152
      %s156 = sphi 0, %s155
      %s172 = sphi 0, %s156
      %s178 = sphi 0, %s180
      %s181 = sphi 0, %s178
      %s182 = sphi 0, %s181
      %s198 = sphi 0, %s182
      %s204 = sphi 0, %s206
      %s207 = sphi 0, %s204
      %s208 = sphi 0, %s207
      %s224 = sphi 0, %s208
      %s228 = sphi 0, %s228
      %s230 = sphi 0, %s228
      %s231 = sphi 0, %s230
      %s245 = sphi 0, %s231
      %s253 = sphi 0, %s255
      %s256 = sphi 0, %s253
      %s257 = sphi 0, %s256
      %s273 = sphi 0, %s257
    $region4: #{tpu_custom_call.1} parent=1 // loop_header_branch
      %20 = sbr.rel (%p18) target = $region8
    $region5: #{tpu_custom_call.1} parent=1 // loop_body
      %s22 = ssub.s32 %s17, 1
      %s23 = ssub.s32 %s17, 2
      %s33 = sadd.s32 1, %s26
      %p34 = scmp.ge.s32.totalorder %s33, 1
      %s35 = scalar_select %p34, 0, %s33
      %s36 = sadd.s32 1, %s25
      %s37 = scalar_select %p34, %s36, %s25
      %p38 = scmp.ge.s32.totalorder %s37, 1
      %s39 = scalar_select %p38, 0, %s37
      %s40 = sadd.s32 1, %s24
      %s41 = scalar_select %p38, %s40, %s24
      %p42 = scmp.ge.s32.totalorder %s41, 2
      %s43 = scalar_select %p42, 0, %s41
      %s44 = ssub.s32 %s24, %s43
      %s45 = ssub.s32 %s25, %s39
      %s46 = sor.u32 %s44, %s45
      %p47 = scmp.eq.s32.totalorder %s46, 0
      %s49 = sadd.s32 %s48, 1
      %s50 = scalar_select %p47, %s48, %s49
      %p53 = pneg %p47
      %p54 = scmp.eq.s32.totalorder %s17, 1
      %p55 = por %p53, %p54
      %p56 = scmp.ne.s32.totalorder %s48, %s51
      %p57 = scmp.eq.s32.totalorder %s17, 0
      %p58 = por %p56, %p57
      %p59 = scmp.ne.s32.totalorder %s48, %s51
      %p60 = scmp.eq.s32.totalorder %s22, 1
      %p61 = por %p59, %p60
      %p62 = scmp.ne.s32.totalorder %s51, %s52
      %p63 = scmp.eq.s32.totalorder %s22, 0
      %p64 = por %p62, %p63
      %p65 = scmp.ne.s32.totalorder %s51, %s52
      %p66 = scmp.eq.s32.totalorder %s23, 1
      %p67 = por %p65, %p66
      %p69 = scmp.ne.s32.totalorder %s52, %s68
      %p70 = scmp.eq.s32.totalorder %s23, 0
      %p71 = por %p69, %p70
      %s72 = ssub.s32 %s24, %s43
      %p73 = scmp.eq.s32.totalorder %s72, 0
      %s75 = sadd.s32 %s74, 1
      %s76 = scalar_select %p73, %s74, %s75
      %p79 = pneg %p73
      %p80 = scmp.eq.s32.totalorder %s17, 1
      %p81 = por %p79, %p80
      %p82 = scmp.ne.s32.totalorder %s74, %s77
      %p83 = scmp.eq.s32.totalorder %s17, 0
      %p84 = por %p82, %p83
      %p85 = scmp.ne.s32.totalorder %s74, %s77
      %p86 = scmp.eq.s32.totalorder %s22, 1
      %p87 = por %p85, %p86
      %p88 = scmp.ne.s32.totalorder %s77, %s78
      %p89 = scmp.eq.s32.totalorder %s22, 0
      %p90 = por %p88, %p89
      %p91 = scmp.ne.s32.totalorder %s77, %s78
      %p92 = scmp.eq.s32.totalorder %s23, 1
      %p93 = por %p91, %p92
      %p95 = scmp.ne.s32.totalorder %s78, %s94
      %p96 = scmp.eq.s32.totalorder %s23, 0
      %p97 = por %p95, %p96
      %s98 = ssub.s32 %s24, %s43
      %p99 = scmp.eq.s32.totalorder %s98, 0
      %s101 = sadd.s32 %s100, 1
      %s102 = scalar_select %p99, %s100, %s101
      %p105 = pneg %p99
      %p106 = scmp.eq.s32.totalorder %s17, 1
      %p107 = por %p105, %p106
      %p108 = scmp.ne.s32.totalorder %s100, %s103
      %p109 = scmp.eq.s32.totalorder %s17, 0
      %p110 = por %p108, %p109
      %p111 = scmp.ne.s32.totalorder %s100, %s103
      %p112 = scmp.eq.s32.totalorder %s22, 1
      %p113 = por %p111, %p112
      %p114 = scmp.ne.s32.totalorder %s103, %s104
      %p115 = scmp.eq.s32.totalorder %s22, 0
      %p116 = por %p114, %p115
      %p117 = scmp.ne.s32.totalorder %s103, %s104
      %p118 = scmp.eq.s32.totalorder %s23, 1
      %p119 = por %p117, %p118
      %p121 = scmp.ne.s32.totalorder %s104, %s120
      %p122 = scmp.eq.s32.totalorder %s23, 0
      %p123 = por %p121, %p122
      %s124 = ssub.s32 %s24, %s43
      %p125 = scmp.eq.s32.totalorder %s124, 0
      %s127 = sadd.s32 %s126, 1
      %s128 = scalar_select %p125, %s126, %s127
      %p131 = pneg %p125
      %p132 = scmp.eq.s32.totalorder %s17, 1
      %p133 = por %p131, %p132
      %p134 = scmp.ne.s32.totalorder %s126, %s129
      %p135 = scmp.eq.s32.totalorder %s17, 0
      %p136 = por %p134, %p135
      %p137 = scmp.ne.s32.totalorder %s126, %s129
      %p138 = scmp.eq.s32.totalorder %s22, 1
      %p139 = por %p137, %p138
      %p140 = scmp.ne.s32.totalorder %s129, %s130
      %p141 = scmp.eq.s32.totalorder %s22, 0
      %p142 = por %p140, %p141
      %p143 = scmp.ne.s32.totalorder %s129, %s130
      %p144 = scmp.eq.s32.totalorder %s23, 1
      %p145 = por %p143, %p144
      %p147 = scmp.ne.s32.totalorder %s130, %s146
      %p148 = scmp.eq.s32.totalorder %s23, 0
      %p149 = por %p147, %p148
      %s150 = ssub.s32 %s26, %s35
      %p151 = scmp.eq.s32.totalorder %s150, 0
      %s153 = sadd.s32 %s152, 1
      %s154 = scalar_select %p151, %s152, %s153
      %p157 = pneg %p151
      %p158 = scmp.eq.s32.totalorder %s17, 1
      %p159 = por %p157, %p158
      %p160 = scmp.ne.s32.totalorder %s152, %s155
      %p161 = scmp.eq.s32.totalorder %s17, 0
      %p162 = por %p160, %p161
      %p163 = scmp.ne.s32.totalorder %s152, %s155
      %p164 = scmp.eq.s32.totalorder %s22, 1
      %p165 = por %p163, %p164
      %p166 = scmp.ne.s32.totalorder %s155, %s156
      %p167 = scmp.eq.s32.totalorder %s22, 0
      %p168 = por %p166, %p167
      %p169 = scmp.ne.s32.totalorder %s155, %s156
      %p170 = scmp.eq.s32.totalorder %s23, 1
      %p171 = por %p169, %p170
      %p173 = scmp.ne.s32.totalorder %s156, %s172
      %p174 = scmp.eq.s32.totalorder %s23, 0
      %p175 = por %p173, %p174
      %s176 = ssub.s32 %s26, %s35
      %p177 = scmp.eq.s32.totalorder %s176, 0
      %s179 = sadd.s32 %s178, 1
      %s180 = scalar_select %p177, %s178, %s179
      %p183 = pneg %p177
      %p184 = scmp.eq.s32.totalorder %s17, 1
      %p185 = por %p183, %p184
      %p186 = scmp.ne.s32.totalorder %s178, %s181
      %p187 = scmp.eq.s32.totalorder %s17, 0
      %p188 = por %p186, %p187
      %p189 = scmp.ne.s32.totalorder %s178, %s181
      %p190 = scmp.eq.s32.totalorder %s22, 1
      %p191 = por %p189, %p190
      %p192 = scmp.ne.s32.totalorder %s181, %s182
      %p193 = scmp.eq.s32.totalorder %s22, 0
      %p194 = por %p192, %p193
      %p195 = scmp.ne.s32.totalorder %s181, %s182
      %p196 = scmp.eq.s32.totalorder %s23, 1
      %p197 = por %p195, %p196
      %p199 = scmp.ne.s32.totalorder %s182, %s198
      %p200 = scmp.eq.s32.totalorder %s23, 0
      %p201 = por %p199, %p200
      %s202 = ssub.s32 %s26, %s35
      %p203 = scmp.eq.s32.totalorder %s202, 0
      %s205 = sadd.s32 %s204, 1
      %s206 = scalar_select %p203, %s204, %s205
      %p209 = pneg %p203
      %p210 = scmp.eq.s32.totalorder %s17, 1
      %p211 = por %p209, %p210
      %p212 = scmp.ne.s32.totalorder %s204, %s207
      %p213 = scmp.eq.s32.totalorder %s17, 0
      %p214 = por %p212, %p213
      %p215 = scmp.ne.s32.totalorder %s204, %s207
      %p216 = scmp.eq.s32.totalorder %s22, 1
      %p217 = por %p215, %p216
      %p218 = scmp.ne.s32.totalorder %s207, %s208
      %p219 = scmp.eq.s32.totalorder %s22, 0
      %p220 = por %p218, %p219
      %p221 = scmp.ne.s32.totalorder %s207, %s208
      %p222 = scmp.eq.s32.totalorder %s23, 1
      %p223 = por %p221, %p222
      %p225 = scmp.ne.s32.totalorder %s208, %s224
      %p226 = scmp.eq.s32.totalorder %s23, 0
      %p227 = por %p225, %p226
      %s229 = sadd.s32 %s228, 1
      %p232 = scmp.eq.s32.totalorder %s17, 1
      %p233 = scmp.ne.s32.totalorder %s228, %s230
      %p234 = scmp.eq.s32.totalorder %s17, 0
      %p235 = por %p233, %p234
      %p236 = scmp.ne.s32.totalorder %s228, %s230
      %p237 = scmp.eq.s32.totalorder %s22, 1
      %p238 = por %p236, %p237
      %p239 = scmp.ne.s32.totalorder %s230, %s231
      %p240 = scmp.eq.s32.totalorder %s22, 0
      %p241 = por %p239, %p240
      %p242 = scmp.ne.s32.totalorder %s230, %s231
      %p243 = scmp.eq.s32.totalorder %s23, 1
      %p244 = por %p242, %p243
      %p246 = scmp.ne.s32.totalorder %s231, %s245
      %p247 = scmp.eq.s32.totalorder %s23, 0
      %p248 = por %p246, %p247
      %s249 = ssub.s32 %s24, %s43
      %s250 = ssub.s32 %s25, %s39
      %s251 = sor.u32 %s249, %s250
      %p252 = scmp.eq.s32.totalorder %s251, 0
      %s254 = sadd.s32 %s253, 1
      %s255 = scalar_select %p252, %s253, %s254
      %p258 = pneg %p252
      %p259 = scmp.eq.s32.totalorder %s17, 1
      %p260 = por %p258, %p259
      %p261 = scmp.ne.s32.totalorder %s253, %s256
      %p262 = scmp.eq.s32.totalorder %s17, 0
      %p263 = por %p261, %p262
      %p264 = scmp.ne.s32.totalorder %s253, %s256
      %p265 = scmp.eq.s32.totalorder %s22, 1
      %p266 = por %p264, %p265
      %p267 = scmp.ne.s32.totalorder %s256, %s257
      %p268 = scmp.eq.s32.totalorder %s22, 0
      %p269 = por %p267, %p268
      %p270 = scmp.ne.s32.totalorder %s256, %s257
      %p271 = scmp.eq.s32.totalorder %s23, 1
      %p272 = por %p270, %p271
      %p274 = scmp.ne.s32.totalorder %s257, %s273
      %p275 = scmp.eq.s32.totalorder %s23, 0
      %p276 = por %p274, %p275
      %p277 = scmp.le.s32.totalorder 1, %s17
      %p278 = scmp.lt.s32.totalorder %s17, 3
      %p279 = pnand %p277, %p278
      %p280 = pneg %p279
      // Predicated region
      $region9: #{tpu_custom_call.1} parent=5 // pred_check
        _
      $region10: #{tpu_custom_call.1} parent=5 // pred_check_branch
        %282 = sbr.rel (%p279) target = $region12
      $region11: #{tpu_custom_call.1} parent=5 // pred_region
        %s283 = ssub.s32 %s17, 1
        // Predicated region
        $region13: #{tpu_custom_call.1} parent=11 // pred_check
          %p284 = pneg %p168
        $region14: #{tpu_custom_call.1} parent=11 // pred_check_branch
          %286 = sbr.rel (%p284) target = $region16
        $region15: #{tpu_custom_call.1} parent=11 // pred_region
          %p287 = scmp.lt.s32.totalorder %s29, 0
          %s288 = scalar_select %p287, %s29, 0
          %s289 = smul.addr %s288, 4
          %s290 = scalar_lea.vmem %s4, %s289
        $region16: #{tpu_custom_call.1} parent=11 // pred_fallthru
          _
        // Predicated region
        $region17: #{tpu_custom_call.1} parent=11 // pred_check
          %p291 = pneg %p194
        $region18: #{tpu_custom_call.1} parent=11 // pred_check_branch
          %293 = sbr.rel (%p291) target = $region20
        $region19: #{tpu_custom_call.1} parent=11 // pred_region
          %p294 = scmp.lt.s32.totalorder %s29, 0
          %s295 = scalar_select %p294, %s29, 0
          %s296 = scalar_lea.vmem %s5, %s295
        $region20: #{tpu_custom_call.1} parent=11 // pred_fallthru
          _
        // Predicated region
        $region21: #{tpu_custom_call.1} parent=11 // pred_check
          %p297 = pneg %p220
        $region22: #{tpu_custom_call.1} parent=11 // pred_check_branch
          %299 = sbr.rel (%p297) target = $region24
        $region23: #{tpu_custom_call.1} parent=11 // pred_region
          %s300 = smul.u32 16, %s29
          %p301 = scmp.lt.s32.totalorder %s300, 15
          %s302 = scalar_select %p301, %s300, 15
          %s303 = smul.addr %s302, 4
          %s304 = scalar_lea.vmem %s6, %s303
          %s305 = smul.u32 16, %s29
        $region24: #{tpu_custom_call.1} parent=11 // pred_fallthru
          _
        // Predicated region
        $region25: #{tpu_custom_call.1} parent=11 // pred_check
          %p306 = pneg %p241
        $region26: #{tpu_custom_call.1} parent=11 // pred_check_branch
          %308 = sbr.rel (%p306) target = $region28
        $region27: #{tpu_custom_call.1} parent=11 // pred_region
          _
        $region28: #{tpu_custom_call.1} parent=11 // pred_fallthru
          _
      $region12: #{tpu_custom_call.1} parent=5 // pred_fallthru
        _
      %p309 = scmp.lt.s32.totalorder %s17, 2
      // Predicated region
      $region29: #{tpu_custom_call.1} parent=5 // pred_check
        %p310 = pneg %p309
      $region30: #{tpu_custom_call.1} parent=5 // pred_check_branch
        %312 = sbr.rel (%p310) target = $region32
      $region31: #{tpu_custom_call.1} parent=5 // pred_region
        // Predicated region
        $region33: #{tpu_custom_call.1} parent=31 // pred_check
          %p313 = pneg %p58
        $region34: #{tpu_custom_call.1} parent=31 // pred_check_branch
          %315 = sbr.rel (%p313) target = $region36
        $region35: #{tpu_custom_call.1} parent=31 // pred_region
          %p316 = scmp.lt.s32.totalorder %s24, 1
          %s317 = scalar_select %p316, %s24, 1
          %p318 = scmp.lt.s32.totalorder %s25, 0
          %s319 = scalar_select %p318, %s25, 0
          %s320 = sadd.s32 %s319, %s317
          %s321 = smul.addr %s320, 8
          %s322 = scalar_lea.vmem %s0, %s321
        $region36: #{tpu_custom_call.1} parent=31 // pred_fallthru
          _
        // Predicated region
        $region37: #{tpu_custom_call.1} parent=31 // pred_check
          %p323 = pneg %p84
        $region38: #{tpu_custom_call.1} parent=31 // pred_check_branch
          %325 = sbr.rel (%p323) target = $region40
        $region39: #{tpu_custom_call.1} parent=31 // pred_region
          %p326 = scmp.lt.s32.totalorder %s24, 1
          %s327 = scalar_select %p326, %s24, 1
          %s328 = scalar_lea.vmem %s1, %s327
        $region40: #{tpu_custom_call.1} parent=31 // pred_fallthru
          _
        // Predicated region
        $region41: #{tpu_custom_call.1} parent=31 // pred_check
          %p329 = pneg %p110
        $region42: #{tpu_custom_call.1} parent=31 // pred_check_branch
          %331 = sbr.rel (%p329) target = $region44
        $region43: #{tpu_custom_call.1} parent=31 // pred_region
          %p332 = scmp.lt.s32.totalorder %s24, 1
          %s333 = scalar_select %p332, %s24, 1
          %s334 = scalar_lea.vmem %s2, %s333
        $region44: #{tpu_custom_call.1} parent=31 // pred_fallthru
          _
        // Predicated region
        $region45: #{tpu_custom_call.1} parent=31 // pred_check
          %p335 = pneg %p136
        $region46: #{tpu_custom_call.1} parent=31 // pred_check_branch
          %337 = sbr.rel (%p335) target = $region48
        $region47: #{tpu_custom_call.1} parent=31 // pred_region
          %p338 = scmp.lt.s32.totalorder %s24, 1
          %s339 = scalar_select %p338, %s24, 1
          %s340 = scalar_lea.vmem %s3, %s339
        $region48: #{tpu_custom_call.1} parent=31 // pred_fallthru
          _
      $region32: #{tpu_custom_call.1} parent=5 // pred_fallthru
        _
      %p341 = scmp.le.s32.totalorder 1, %s17
      %p342 = scmp.lt.s32.totalorder %s17, 3
      %p343 = pnand %p341, %p342
      %p344 = pneg %p343
      // Predicated region
      $region49: #{tpu_custom_call.1} parent=5 // pred_check
        _
      $region50: #{tpu_custom_call.1} parent=5 // pred_check_branch
        %346 = sbr.rel (%p343) target = $region52
      $region51: #{tpu_custom_call.1} parent=5 // pred_region
        %s347 = ssub.s32 %s17, 1
        %p348 = scmp.lt.s32.totalorder %s27, 1
        %s349 = scalar_select %p348, %s27, 1
        %p350 = scmp.lt.s32.totalorder %s28, 0
        %s351 = scalar_select %p350, %s28, 0
        %s352 = sadd.s32 %s351, %s349
        %s353 = smul.addr %s352, 8
        %s354 = scalar_lea.vmem %s0, %s353
        %p355 = pneg %p64
        %p356 = pneg %p61
        %p357 = scmp.lt.s32.totalorder %s27, 1
        %s358 = scalar_select %p357, %s27, 1
        %s359 = scalar_lea.vmem %s1, %s358
        %p360 = pneg %p90
        %p361 = pneg %p87
        %p362 = scmp.lt.s32.totalorder %s27, 1
        %s363 = scalar_select %p362, %s27, 1
        %s364 = scalar_lea.vmem %s2, %s363
        %p365 = pneg %p116
        %p366 = pneg %p113
        %p367 = scmp.lt.s32.totalorder %s27, 1
        %s368 = scalar_select %p367, %s27, 1
        %s369 = scalar_lea.vmem %s3, %s368
        %p370 = pneg %p142
        %p371 = pneg %p139
        %p372 = scmp.lt.s32.totalorder %s29, 0
        %s373 = scalar_select %p372, %s29, 0
        %s374 = smul.addr %s373, 4
        %s375 = scalar_lea.vmem %s4, %s374
        %p376 = pneg %p168
        %p377 = pneg %p165
        %p378 = scmp.lt.s32.totalorder %s29, 0
        %s379 = scalar_select %p378, %s29, 0
        %s380 = scalar_lea.vmem %s5, %s379
        %p381 = pneg %p194
        %p382 = pneg %p191
        %s383 = smul.u32 16, %s29
        %p384 = scmp.lt.s32.totalorder %s383, 15
        %s385 = scalar_select %p384, %s383, 15
        %s386 = smul.addr %s385, 4
        %s387 = scalar_lea.vmem %s6, %s386
        %p388 = pneg %p220
        %p389 = pneg %p217
        %p390 = pneg %p241
        %p391 = pneg %p238
        %p392 = pneg %p269
        %p393 = pneg %p266
        %s394 = sand.u32 %s256, 1
        %s395 = scalar_lea.sflag [#allocation5], %s394
        %s396 = sand.u32 %s256, 1
        %s397 = smul.addr %s396, 8
        %s398 = scalar_lea.vmem [#allocation4], %s397
        %p399 = scmp.lt.s32.totalorder %s27, 1
        %s400 = scalar_select %p399, %s27, 1
        %p401 = scmp.lt.s32.totalorder %s28, 0
        %s402 = scalar_select %p401, %s28, 0
        %s403 = sadd.s32 %s402, %s400
        %s404 = smul.addr %s403, 8
        %s405 = scalar_lea.vmem %s0, %s404
        %p406 = scmp.lt.s32.totalorder %s27, 1
        %s407 = scalar_select %p406, %s27, 1
        %s408 = scalar_lea.vmem %s1, %s407
        %p409 = scmp.lt.s32.totalorder %s27, 1
        %s410 = scalar_select %p409, %s27, 1
        %s411 = scalar_lea.vmem %s2, %s410
        %p412 = scmp.lt.s32.totalorder %s27, 1
        %s413 = scalar_select %p412, %s27, 1
        %s414 = scalar_lea.vmem %s3, %s413
        %p415 = scmp.lt.s32.totalorder %s29, 0
        %s416 = scalar_select %p415, %s29, 0
        %s417 = smul.addr %s416, 4
        %s418 = scalar_lea.vmem %s4, %s417
        %p419 = scmp.lt.s32.totalorder %s29, 0
        %s420 = scalar_select %p419, %s29, 0
        %s421 = scalar_lea.vmem %s5, %s420
        %s422 = smul.u32 16, %s29
        %p423 = scmp.lt.s32.totalorder %s422, 15
        %s424 = scalar_select %p423, %s422, 15
        %s425 = smul.addr %s424, 4
        %s426 = scalar_lea.vmem %s6, %s425
        %s427 = smul.u32 16, %s29
        %p429 = scmp.eq.s32.totalorder %s29, 0
        // Predicated region
        $region53: #{tpu_custom_call.1} parent=51 // pred_check
          %p430 = pneg %p429
        $region54: #{tpu_custom_call.1} parent=51 // pred_check_branch
          %432 = sbr.rel (%p430) target = $region56
        $region55: #{tpu_custom_call.1} parent=51 // pred_region
          %v433 = vld [vmem:[%s405] sm:$0xff]
          %vm434 = vcmask 261120
          %v435 = vsel %vm434, %v433, 0.0
          %436 = vadd.xlane.f32.xlu0 %v435
          %v437 = vpop.xlane.xlu0 %436
          %v438 = vrcp.pop 32.0
          %v439 = vmul.f32 %v437, %v438
          %v440 = vsub.f32 %v433, %v439
          %v441 = vmul.f32 %v440, %v440
          %v442 = vsel %vm434, %v441, 0.0
          %443 = vadd.xlane.f32.xlu0 %v442
          %v444 = vpop.xlane.xlu0 %443
          %v445 = vmul.f32 %v444, %v438
          %v446 = vadd.f32 %v445, 1e-06
          %v447 = vrsqrt.pop %v446
          %v448 = vmul.f32 %v440, %v447
          %v449 = vld [vmem:[%s411] sm:$0x1]
          %v450 = vadd.f32 %v449, 1.0
          %v452 = vlaneseq
          %v453 = vshrl.u32 %v452, 7
          %v454 = vsub.s32 0, %v453
          %v455 = vrot.slane %v450, %v454
          %v457 = vmul.f32 %v448, %v455
          %v458 = vld [vmem:[%s408] sm:$0x1]
          %v460 = vlaneseq
          %v461 = vshrl.u32 %v460, 7
          %v462 = vsub.s32 0, %v461
          %v463 = vrot.slane %v458, %v462
          %v465 = vadd.f32 %v457, %v463
          %v466 = vpack.c.bf16 %v465, %v465
          %vm467 = vcmask 257024
          %468 = vst.msk [vmem:[#allocation2] sm:$0xf] %vm467, %v466
          %469 = vst.msk [vmem:[#allocation3] sm:$0xff] %vm434, 0.0
        $region56: #{tpu_custom_call.1} parent=51 // pred_fallthru
          _
        %v470 = vld [vmem:[#allocation2] sm:$0xf]
        %v471 = vld [vmem:[%s418] sm:$0xf]
        %v472 = vld [vmem:[%s418 + $0x4] sm:$0xf]
        %v473 = vld [vmem:[%s418 + $0x8] sm:$0xf]
        %v474 = vld [vmem:[%s418 + $0xc] sm:$0xf]
        %v475 = vld [vmem:[%s421] sm:$0x1]
        %v477 = vlaneseq
        %v478 = vshrl.u32 %v477, 7
        %v479 = vsub.s32 0, %v478
        %v480 = vrot.slane %v475, %v479
        %v486 = vunpack.c.l.b16 %v471
        %v487 = vunpack.c.l.b16 %v472
        %v488 = vunpack.c.l.b16 %v473
        %v489 = vunpack.c.l.b16 %v474
        %v490 = vpack.c.b16 %v487, %v486
        %v491 = vpack.c.b16 %v489, %v488
        %vm494 = vcmask 261120
        %v496 = vsel %vm494, %v470, 0
        %498 = vmatprep.subr.bf16.mxu0 0
        %499 = vmatpush1.bf16.msra.mxu0 0
        %500 = vmatprep.subr.bf16.mxu0 0
        %501 = vmatpush1.bf16.msra.mxu0 0
        %502 = vmatprep.subr.bf16.mxu0 0
        %503 = vmatpush1.bf16.msra.mxu0 0
        %504 = vmatprep.subr.bf16.mxu0 0
        %505 = vmatpush1.bf16.msra.mxu0 0
        %506 = vmatprep.subr.bf16.mxu0 0
        %507 = vmatpush1.bf16.msra.mxu0 0
        %508 = vmatprep.subr.bf16.mxu0 0
        %509 = vmatpush1.bf16.msra.mxu0 0
        %510 = vmatprep.subr.bf16.mxu0 0
        %511 = vmatpush1.bf16.msra.mxu0 %v491
        %512 = vmatprep.subr.bf16.mxu0 0
        %513 = vmatpush1.bf16.msra.mxu0 %v490
        %514 = vmatprep.subr.bf16.mxu0 0
        %515 = vmatpush2.bf16.msra.mxu0 0
        %516 = vmatprep.subr.bf16.mxu0 0
        %517 = vmatpush2.bf16.msra.mxu0 0
        %518 = vmatprep.subr.bf16.mxu0 0
        %519 = vmatpush2.bf16.msra.mxu0 0
        %520 = vmatprep.subr.bf16.mxu0 0
        %521 = vmatpush2.bf16.msra.mxu0 0
        %522 = vmatprep.subr.bf16.mxu0 0
        %523 = vmatpush2.bf16.msra.mxu0 0
        %524 = vmatprep.subr.bf16.mxu0 0
        %525 = vmatpush2.bf16.msra.mxu0 0
        %526 = vmatprep.subr.bf16.mxu0 0
        %527 = vmatpush2.bf16.msra.mxu0 0
        %528 = vmatprep.subr.bf16.mxu0 0
        %529 = vmatpush2.bf16.msra.mxu0 0
        %530 = vmatprep.mubr.bf16.mxu0 0
        %531 = vmatmul.mubr.bf16.gmra.mxu0 %v496
        %v532 = vpop.f32.mrf.mxu0
        %v533 = vadd.f32 %v480, %v532
        %v534 = vpop.f32.mrf.mxu0
        %v535 = vpop.f32.mrf.mxu0
        %v536 = vpop.f32.mrf.mxu0
        %537 = vdwg.mxu0
        %v538 = vmul.f32 %v533, 0.5
        %v539 = vmul.f32 %v533, 0.044715
        %v540 = vmul.f32 %v539, %v533
        %v541 = vmul.f32 %v540, %v533
        %v542 = vadd.f32 %v533, %v541
        %v543 = vmul.f32 %v542, 0.7978846
        %v544 = vtanh.pop %v543
        %v545 = vadd.f32 %v544, 1.0
        %v546 = vmul.f32 %v538, %v545
        %v547 = vld [vmem:[#allocation3] sm:$0xff]
        %v548 = vpack.c.bf16 %v546, %v546
        %v549 = vld [vmem:[%s426] sm:$0xf]
        %v550 = vld [vmem:[%s426 + $0x4] sm:$0xf]
        %v551 = vld [vmem:[%s426 + $0x8] sm:$0xf]
        %v552 = vld [vmem:[%s426 + $0xc] sm:$0xf]
        %v553 = vld [vmem:[%s426 + $0x10] sm:$0xf]
        %v554 = vld [vmem:[%s426 + $0x14] sm:$0xf]
        %v555 = vld [vmem:[%s426 + $0x18] sm:$0xf]
        %v556 = vld [vmem:[%s426 + $0x1c] sm:$0xf]
        %v557 = vld [vmem:[%s426 + $0x20] sm:$0xf]
        %v558 = vld [vmem:[%s426 + $0x24] sm:$0xf]
        %v559 = vld [vmem:[%s426 + $0x28] sm:$0xf]
        %v560 = vld [vmem:[%s426 + $0x2c] sm:$0xf]
        %v561 = vld [vmem:[%s426 + $0x30] sm:$0xf]
        %v562 = vld [vmem:[%s426 + $0x34] sm:$0xf]
        %v563 = vld [vmem:[%s426 + $0x38] sm:$0xf]
        %v564 = vld [vmem:[%s426 + $0x3c] sm:$0xf]
        %v581 = vunpack.c.l.b16 %v549
        %v582 = vunpack.c.l.b16 %v550
        %v583 = vunpack.c.l.b16 %v551
        %v584 = vunpack.c.l.b16 %v552
        %v585 = vunpack.c.l.b16 %v553
        %v586 = vunpack.c.l.b16 %v554
        %v587 = vunpack.c.l.b16 %v555
        %v588 = vunpack.c.l.b16 %v556
        %v589 = vunpack.c.l.b16 %v557
        %v590 = vunpack.c.l.b16 %v558
        %v591 = vunpack.c.l.b16 %v559
        %v592 = vunpack.c.l.b16 %v560
        %v593 = vunpack.c.l.b16 %v561
        %v594 = vunpack.c.l.b16 %v562
        %v595 = vunpack.c.l.b16 %v563
        %v596 = vunpack.c.l.b16 %v564
        %v597 = vpack.c.b16 %v582, %v581
        %v598 = vpack.c.b16 %v584, %v583
        %v599 = vpack.c.b16 %v586, %v585
        %v600 = vpack.c.b16 %v588, %v587
        %v601 = vpack.c.b16 %v590, %v589
        %v602 = vpack.c.b16 %v592, %v591
        %v603 = vpack.c.b16 %v594, %v593
        %v604 = vpack.c.b16 %v596, %v595
        %613 = vmatprep.subr.bf16.mxu0 0
        %614 = vmatpush1.bf16.msra.mxu0 %v604
        %615 = vmatprep.subr.bf16.mxu0 0
        %616 = vmatpush1.bf16.msra.mxu0 %v603
        %617 = vmatprep.subr.bf16.mxu0 0
        %618 = vmatpush1.bf16.msra.mxu0 %v602
        %619 = vmatprep.subr.bf16.mxu0 0
        %620 = vmatpush1.bf16.msra.mxu0 %v601
        %621 = vmatprep.subr.bf16.mxu0 0
        %622 = vmatpush1.bf16.msra.mxu0 %v600
        %623 = vmatprep.subr.bf16.mxu0 0
        %624 = vmatpush1.bf16.msra.mxu0 %v599
        %625 = vmatprep.subr.bf16.mxu0 0
        %626 = vmatpush1.bf16.msra.mxu0 %v598
        %627 = vmatprep.subr.bf16.mxu0 0
        %628 = vmatpush1.bf16.msra.mxu0 %v597
        %629 = vmatprep.subr.bf16.mxu0 0
        %630 = vmatpush2.bf16.msra.mxu0 0
        %631 = vmatprep.subr.bf16.mxu0 0
        %632 = vmatpush2.bf16.msra.mxu0 0
        %633 = vmatprep.subr.bf16.mxu0 0
        %634 = vmatpush2.bf16.msra.mxu0 0
        %635 = vmatprep.subr.bf16.mxu0 0
        %636 = vmatpush2.bf16.msra.mxu0 0
        %637 = vmatprep.subr.bf16.mxu0 0
        %638 = vmatpush2.bf16.msra.mxu0 0
        %639 = vmatprep.subr.bf16.mxu0 0
        %640 = vmatpush2.bf16.msra.mxu0 0
        %641 = vmatprep.subr.bf16.mxu0 0
        %642 = vmatpush2.bf16.msra.mxu0 0
        %643 = vmatprep.subr.bf16.mxu0 0
        %644 = vmatpush2.bf16.msra.mxu0 0
        %645 = vmatprep.mubr.bf16.mxu0 0
        %646 = vmatmul.mubr.bf16.gmra.mxu0 %v548
        %v647 = vpop.f32.mrf.mxu0
        %v648 = vadd.f32 0.0, %v647
        %v649 = vpop.f32.mrf.mxu0
        %v650 = vpop.f32.mrf.mxu0
        %v651 = vpop.f32.mrf.mxu0
        %652 = vdwg.mxu0
        %v653 = vadd.f32 %v547, %v648
        %654 = vst.msk [vmem:[#allocation3] sm:$0xff] %vm494, %v653
        // Predicated region
        $region57: #{tpu_custom_call.1} parent=51 // pred_check
          %p655 = pneg %p429
        $region58: #{tpu_custom_call.1} parent=51 // pred_check_branch
          %657 = sbr.rel (%p655) target = $region60
        $region59: #{tpu_custom_call.1} parent=51 // pred_region
          %v658 = vld [vmem:[#allocation3] sm:$0xff]
          %v659 = vld [vmem:[%s7] sm:$0x1]
          %v661 = vlaneseq
          %v662 = vshrl.u32 %v661, 7
          %v663 = vsub.s32 0, %v662
          %v664 = vrot.slane %v659, %v663
          %v666 = vadd.f32 %v658, %v664
          %v667 = vld [vmem:[%s405] sm:$0xff]
          %v668 = vld [vmem:[%s414] sm:$0x1]
          %v670 = vlaneseq
          %v671 = vshrl.u32 %v670, 7
          %v672 = vsub.s32 0, %v671
          %v673 = vrot.slane %v668, %v672
          %v675 = vmul.f32 %v673, %v666
          %v676 = vadd.f32 %v667, %v675
          %677 = vst.msk [vmem:[%s398] sm:$0xff] %vm494, %v676
        $region60: #{tpu_custom_call.1} parent=51 // pred_fallthru
          _
        %s678 = sand.u32 %s256, 1
        %s679 = scalar_lea.sflag [#allocation5], %s678
        %s680 = sand.u32 %s256, 1
        %s681 = smul.addr %s680, 8
        %s682 = scalar_lea.vmem [#allocation4], %s681
        // Predicated region
        $region61: #{tpu_custom_call.1} parent=51 // pred_check
          %p683 = pneg %p266
        $region62: #{tpu_custom_call.1} parent=51 // pred_check_branch
          %685 = sbr.rel (%p683) target = $region64
        $region63: #{tpu_custom_call.1} parent=51 // pred_region
          %s687 = ssub.s32 128, 128
          %688 = vsyncadd %s679, %s687
          %s689 = sadd.s32 %s28, %s27
          %s690 = smul.addr %s689, 128
          %s691 = scalar_lea.hbm %s8, %s690
          %s693 = sshll.u32 %s682, 4
          %s694 = int_to_ptr.vmem [resolvable:$true] %s693
          %696 = dma.vmem_to_hbm [thread:$0]  %s694, 128, %s691, %s679
        $region64: #{tpu_custom_call.1} parent=51 // pred_fallthru
          _
      $region52: #{tpu_custom_call.1} parent=5 // pred_fallthru
        _
      %p697 = scmp.le.s32.totalorder 2, %s17
      // Predicated region
      $region65: #{tpu_custom_call.1} parent=5 // pred_check
        %p698 = pneg %p697
      $region66: #{tpu_custom_call.1} parent=5 // pred_check_branch
        %700 = sbr.rel (%p698) target = $region68
      $region67: #{tpu_custom_call.1} parent=5 // pred_region
        %s701 = ssub.s32 %s17, 2
        // Predicated region
        $region69: #{tpu_custom_call.1} parent=67 // pred_check
          %p702 = pneg %p272
        $region70: #{tpu_custom_call.1} parent=67 // pred_check_branch
          %704 = sbr.rel (%p702) target = $region72
        $region71: #{tpu_custom_call.1} parent=67 // pred_region
          %s705 = sand.u32 %s257, 1
          %s706 = scalar_lea.sflag [#allocation5], %s705
          %s707 = sand.u32 %s257, 1
          %s708 = smul.addr %s707, 8
          %s709 = scalar_lea.vmem [#allocation4], %s708
          %710 = dma.done %s706, 128
        $region72: #{tpu_custom_call.1} parent=67 // pred_fallthru
          _
      $region68: #{tpu_custom_call.1} parent=5 // pred_fallthru
        _
    $region6: #{tpu_custom_call.1} parent=1 // loop_footer
      %s21 = sadd.s32 1, %s17
    $region7: #{tpu_custom_call.1} parent=1 // loop_footer_branch
      %16 = sbr.rel target = $region3
    $region8: #{tpu_custom_call.1} parent=1 // loop_exit
      _
    %711 = vsyncpa [#allocation5], 1
    %s712 = scalar_lea.sflag [#allocation5], 1
    %713 = vsyncpa %s712, 1

</llo_original>
